<compile_context>
chip_gen: v5e
topology: v5e:2x2
jax: 0.10.0
libtpu: 0.0.40
codegen_flags: <defaults>
</compile_context>

<pallas_src>
import math

import jax
import jax.numpy as jnp
from jax.experimental import pallas as pl
from jax.experimental.pallas import tpu as pltpu


def _featureless_embedding_kernel(emb_ref, out_ref):
    # emb_ref: (1, d_wide) VMEM-resident embedding row (constant across grid).
    # out_ref: (tile_rows, d_wide) output tile for this grid step.
    out_ref[...] = jnp.broadcast_to(emb_ref[...], out_ref.shape)


def _sublane_pack(dtype) -> int:
    # Rows per packed vreg sublane group: f32->8, bf16->16, int8/fp8->32.
    return {1: 32, 2: 16, 4: 8}.get(jnp.dtype(dtype).itemsize, 8)


def _round_up(a: int, m: int) -> int:
    return ((a + m - 1) // m) * m


def featureless_embedding(
    x: jax.Array,
    embedding: jax.Array,
    *,
    target_tile_bytes: int = 8 * 1024 * 1024,
) -> jax.Array:
    """Pallas equivalent of FeaturelessEmbedding.forward.

    x:         any array whose leading axis is the batch size (features ignored).
    embedding: (1, d_model) parameter.
    returns:   (batch, d_model), each row equal to `embedding`.
    """
    n = int(x.shape[0])
    d_model = int(embedding.shape[-1])
    dtype = embedding.dtype
    emb2d = embedding.reshape(1, d_model)

    if n == 0:
        return jnp.zeros((0, d_model), dtype=dtype)

    # --- Lane densification (gcd fold): pack k batch rows into the lane axis
    # so the output last dim k*d_model is a multiple of 128 (unmasked vst,
    # dense writeback DMA). d_model=48 -> k=8 -> d_wide=384, d_model=32 -> k=4.
    if d_model % 128 == 0:
        k = 1
    else:
        k = 128 // math.gcd(d_model, 128)

    n_main = (n // k) * k
    if n_main == 0:
        # Batch too small to fold even one group -> lane-sparse fallback
        # (block last dim equals the full array last dim, which Pallas allows).
        k = 1
        n_main = n
    rem = n - n_main  # <= k-1 leftover rows, handled outside the kernel.

    n_rows = n_main // k
    d_wide = d_model * k
    assert d_wide == k * d_model
    emb_wide = jnp.tile(emb2d, (1, k)) if k > 1 else emb2d

    # --- Tile the batch axis. ~8 MiB output blocks amortize the ~0.35 us
    # per-grid-step overhead (important on v7x's 3.2 TB/s HBM); rows rounded
    # to the dtype's sublane packing.
    itemsize = jnp.dtype(dtype).itemsize
    sub = _sublane_pack(dtype)
    bytes_per_row = d_wide * itemsize
    target_rows = max(sub, (target_tile_bytes // bytes_per_row) // sub * sub)

    if n_rows > target_rows:
        tile_rows = int(target_rows)  # grid >= 2 automatically
    elif n_rows > sub:
        # Everything would fit in one block: split into 2 steps anyway so the
        # "parallel" grid axis shards across v7x's two TensorCores.
        tile_rows = _round_up(pl.cdiv(n_rows, 2), sub)
    else:
        tile_rows = n_rows  # single tiny block (full-extent dims)
    grid = (pl.cdiv(n_rows, tile_rows),)

    # Double-buffered output tiles + the tiny resident embedding row + slack.
    tile_bytes = tile_rows * bytes_per_row
    vmem_limit = int(2 * tile_bytes + 2 * bytes_per_row + (4 << 20))

    out_main = pl.pallas_call(
        _featureless_embedding_kernel,
        out_shape=jax.ShapeDtypeStruct((n_rows, d_wide), dtype),
        grid=grid,
        in_specs=[pl.BlockSpec((1, d_wide), lambda i: (0, 0))],
        out_specs=pl.BlockSpec((tile_rows, d_wide), lambda i: (i, 0)),
        compiler_params=pltpu.CompilerParams(
            dimension_semantics=("parallel",),
            vmem_limit_bytes=vmem_limit,
        ),
        cost_estimate=pl.CostEstimate(
            flops=0,
            transcendentals=0,
            bytes_accessed=int(n_rows * d_wide * itemsize + d_wide * itemsize),
        ),
    )(emb_wide)

    # Un-fold the lane-packed rows back to (n_main, d_model). The row-major
    # reshape is exact ONLY because every packed row is k identical copies of
    # the embedding; do not reuse this path for non-uniform rows.
    out_main = out_main.reshape(n_main, d_model)

    if rem > 0:
        # <= k-1 leftover rows: trivial broadcast in the wrapper keeps the
        # bulk of the bytes on the lane-dense kernel path.
        out_rem = jnp.broadcast_to(emb2d, (rem, d_model)).astype(dtype)
        return jnp.concatenate([out_main, out_rem], axis=0)
    return out_main


if __name__ == "__main__":
    key = jax.random.PRNGKey(0)
    k_emb, k_x = jax.random.split(key)

    # Case 1: d_model=32 -> gcd fold k=4, single small block.
    d_model, batch = 32, 8
    embedding = jax.random.normal(k_emb, (1, d_model), dtype=jnp.float32)
    x = jax.random.normal(k_x, (batch, 4), dtype=jnp.float32)  # features ignored
    out = jax.block_until_ready(featureless_embedding(x, embedding))
    ref = jnp.broadcast_to(embedding, (batch, d_model))
    assert out.shape == (batch, d_model), out.shape
    assert out.dtype == jnp.float32, out.dtype
    assert bool(jnp.array_equal(out, ref)), "case 1 mismatch vs reference broadcast"

    # Case 2: force a multi-step grid with a ragged last block
    # (tiny tile target -> tile_rows=8, n_rows=10, grid=(2,)).
    n2 = 40
    x2 = jnp.zeros((n2, 4), dtype=jnp.float32)
    out2 = jax.block_until_ready(
        featureless_embedding(x2, embedding, target_tile_bytes=4096)
    )
    assert bool(
        jnp.array_equal(out2, jnp.broadcast_to(embedding, (n2, d_model)))
    ), "case 2 mismatch (tiled / ragged path)"

    # Case 3: d_model=48 -> gcd fold k=8 with a remainder (n=10 -> 8 folded + 2).
    d3, n3 = 48, 10
    emb3 = jax.random.normal(k_emb, (1, d3), dtype=jnp.float32)
    x3 = jnp.zeros((n3, 4), dtype=jnp.float32)
    out3 = jax.block_until_ready(featureless_embedding(x3, emb3))
    assert bool(
        jnp.array_equal(out3, jnp.broadcast_to(emb3, (n3, d3)))
    ), "case 3 mismatch (gcd fold + remainder path)"

    # Case 4: bf16 (sublane pack 16) + forced >=2-step grid for megacore split.
    d4, n4 = 64, 256
    emb4 = jax.random.normal(k_emb, (1, d4), dtype=jnp.bfloat16)
    x4 = jnp.zeros((n4, 4), dtype=jnp.float32)
    out4 = jax.block_until_ready(featureless_embedding(x4, emb4))
    assert out4.dtype == jnp.bfloat16, out4.dtype
    assert bool(
        jnp.array_equal(out4, jnp.broadcast_to(emb4, (n4, d4)))
    ), "case 4 mismatch (bf16 / 2-step grid path)"

    print("KERNEL_OK")
</pallas_src>

<mosaic_0001>
module attributes {stable_mosaic.version = 11 : i64} {
  func.func @_featureless_embedding_kernel(%arg0: i32, %arg1: memref<1x128xf32, #tpu.memory_space<vmem>>, %arg2: memref<2x128xf32, #tpu.memory_space<vmem>>) attributes {dimension_semantics = [#tpu.dimension_semantics<parallel>], iteration_bounds = array<i64: 1>, scalar_prefetch = 0 : i64, scratch_operands = 0 : i64, tpu.core_type = #tpu.core_type<tc>, window_params = [{pipeline_mode = #tpu.pipeline_mode<synchronous>, transform_indices = @transform_0, window_bounds = array<i64: 1, 128>}, {transform_indices = @transform_1, window_bounds = array<i64: 2, 128>}]} {
    %c0 = arith.constant 0 : index
    %c0_0 = arith.constant 0 : index
    %0 = vector.load %arg1[%c0, %c0_0] : memref<1x128xf32, #tpu.memory_space<vmem>>, vector<1x128xf32>
    %1 = vector.shape_cast %0 : vector<1x128xf32> to vector<1x128xf32>
    %2 = vector.broadcast %1 : vector<1x128xf32> to vector<2x128xf32>
    %c0_1 = arith.constant 0 : index
    %c0_2 = arith.constant 0 : index
    %3 = vector.load %arg2[%c0_1, %c0_2] : memref<2x128xf32, #tpu.memory_space<vmem>>, vector<2x128xf32>
    tpu.vector_store %arg2[%c0_1, %c0_2], %2 {strides = array<i32>} : memref<2x128xf32, #tpu.memory_space<vmem>>, vector<2x128xf32>,
    return
  }
  func.func @transform_0(%arg0: i32) -> (i32, i32) {
    %c0_i32 = arith.constant 0 : i32
    %c0_i32_0 = arith.constant 0 : i32
    %c0_i32_1 = arith.constant 0 : i32
    return %c0_i32, %c0_i32_0 : i32, i32
  }
  func.func @transform_1(%arg0: i32) -> (i32, i32) {
    %c0_i32 = arith.constant 0 : i32
    %c0_i32_0 = arith.constant 0 : i32
    return %arg0, %c0_i32 : i32, i32
  }
}

</mosaic_0001>

<llo_original>
// kernel: tpu_custom_call.1
$region0: #{tpu_custom_call.1}
  #allocation0 [shape = 'u32[]', space=smem, size = 0x4, offset = 0x4, fixed_abs, tag = 'smem constant byte address 0x4 - core index']
  #allocation1 [shape = 'u32[72,128]{1,0:T(1,128)}', space=vmem, size = 0x9000, scoped, tag = 'internal scratch']
  %s0 = inlined_call_operand.hbm [shape: f32[1,128], index: 0, kind: input, shape index: {}]
  %s1 = inlined_call_operand.hbm [shape: f32[2,128], index: 1, kind: output, shape index: {}]
  %s2 = sld [smem:[#allocation0]]
  $region18: #{tpu_custom_call.1} parent=0
    _
  %s4 = ssub.s32 1, %s2
  %s5 = scalar_select 0, %s4, %s2
  $region1: #{tpu_custom_call.1} parent=0
    #allocation2 [shape = 'u8[512]{0}', space=vmem, size = 0x400, scoped, tag = 'input window, operand 0, single buffered']
    #allocation3 [shape = 's32[1]{0}', space=sflag, size = 0x4, scoped, tag = 'scoped memory for tpu_custom_call.1']
    #allocation4 [shape = 's32[1]{0}', space=sflag, size = 0x4, scoped, tag = 'scoped memory for tpu_custom_call.1']
    #allocation5 [shape = 'u8[1024]{0}', space=vmem, size = 0x400, scoped, tag = 'output window, operand 0, single buffered']
    %6 = vsyncpa [#allocation3], 0
    %7 = vsyncpa [#allocation4], 0
    // Predicated region
    $region2: #{tpu_custom_call.1} parent=1 // pred_check
      _
    $region3: #{tpu_custom_call.1} parent=1 // pred_check_branch
      %9 = sbr.rel (0) target = $region5
    $region4: #{tpu_custom_call.1} parent=1 // pred_region
      %11 = vsyncadd [#allocation3], 0
      %s13 = sshll.u32 %s0, 4
      %s14 = int_to_ptr.hbm [resolvable:$true] %s13
      %s15 = sshll.u32 [#allocation2], 4
      %s16 = int_to_ptr.vmem [resolvable:$true] %s15
      %18 = dma.hbm_to_vmem [thread:$0]  %s14, 16, %s16, [#allocation3]
    $region5: #{tpu_custom_call.1} parent=1 // pred_fallthru
      _
    // Predicated region
    $region6: #{tpu_custom_call.1} parent=1 // pred_check
      _
    $region7: #{tpu_custom_call.1} parent=1 // pred_check_branch
      %20 = sbr.rel (0) target = $region9
    $region8: #{tpu_custom_call.1} parent=1 // pred_region
      %22 = dma.done [#allocation3], 16
    $region9: #{tpu_custom_call.1} parent=1 // pred_fallthru
      _
    %v23 = vld [vmem:[#allocation2] sm:$0x1]
    %v25 = vperm.slane %v23, 0
    %27 = vst [vmem:[#allocation5] sm:$0x3] %v25
    // Predicated region
    $region10: #{tpu_custom_call.1} parent=1 // pred_check
      _
    $region11: #{tpu_custom_call.1} parent=1 // pred_check_branch
      %29 = sbr.rel (0) target = $region13
    $region12: #{tpu_custom_call.1} parent=1 // pred_region
      %31 = vsyncadd [#allocation4], 0
      %s33 = sshll.u32 [#allocation5], 4
      %s34 = int_to_ptr.vmem [resolvable:$true] %s33
      %s35 = sshll.u32 %s1, 4
      %s36 = int_to_ptr.hbm [resolvable:$true] %s35
      %38 = dma.vmem_to_hbm [thread:$0]  %s34, 32, %s36, [#allocation4]
    $region13: #{tpu_custom_call.1} parent=1 // pred_fallthru
      _
    // Predicated region
    $region14: #{tpu_custom_call.1} parent=1 // pred_check
      _
    $region15: #{tpu_custom_call.1} parent=1 // pred_check_branch
      %40 = sbr.rel (0) target = $region17
    $region16: #{tpu_custom_call.1} parent=1 // pred_region
      %42 = dma.done [#allocation4], 32
    $region17: #{tpu_custom_call.1} parent=1 // pred_fallthru
      _
    %43 = vsyncpa [#allocation3], 1
    %44 = vsyncpa [#allocation4], 1

</llo_original>
